<compile_context>
chip_gen: v5e
topology: v5e:2x2
jax: 0.10.0
libtpu: 0.0.40
codegen_flags: <defaults>
</compile_context>

<pallas_src>
import jax
import jax.numpy as jnp
from jax.experimental import pallas as pl
from jax.experimental.pallas import tpu as pltpu


_ROWS_PER_GROUP = 64                     # batch rows packed per slab row
_IN_LANES = _ROWS_PER_GROUP * 4          # 256 input lanes per slab row
_OUT_LANES = _ROWS_PER_GROUP * 2         # 128 output lanes per slab row
_GROUP_ALIGN = 8                         # packed rows aligned to sublane (8)


def _round_up(x, m):
    return -(-x // m) * m


def _folded_kernel(x_ref, w_ref, b_ref, o_ref):
    # x_ref: (TB, 256) packed input  (64 batch rows x 4 features per slab row)
    # w_ref: (256, 128) block-diagonal effective weight (constant across grid)
    # b_ref: (1, 128)   tiled effective bias
    # o_ref: (TB, 128)  packed output (64 batch rows x 2 logits per slab row)
    o_ref[...] = (
        jnp.dot(x_ref[...], w_ref[...], preferred_element_type=jnp.float32)
        + b_ref[...]
    )


def _fold_params(conv_w, conv_b, fc_w):
    """Collapse conv1 + fc (both linear) into a single affine map on (B, 4)."""
    C = conv_w.shape[0]
    wc = conv_w.reshape(C, 3).T.astype(jnp.float32)   # (3, C): wc[k,c] = conv_w[c,0,k,0]
    bc = conv_b.reshape(1, C).astype(jnp.float32)     # (1, C)
    # Channel-major flatten of (B, C, 2, 1): flat index m = c*2 + i.
    w0 = fc_w[:, 0::2].T.astype(jnp.float32)          # (C, 2)  spatial i = 0
    w1 = fc_w[:, 1::2].T.astype(jnp.float32)          # (C, 2)  spatial i = 1
    a0 = wc @ w0                                      # (3, 2)
    a1 = wc @ w1                                      # (3, 2)
    w_eff = jnp.zeros((4, 2), jnp.float32)
    w_eff = w_eff.at[0:3].add(a0)                     # overlap-add of the two
    w_eff = w_eff.at[1:4].add(a1)                     # sliding conv windows
    b_eff = (bc @ (w0 + w1)).reshape(2)               # (2,)
    return w_eff, b_eff


def cf_conv_linear_net_pallas(x_nchw, conv_w, conv_b, fc_w, *, block_rows=8192):
    """x_nchw: (B, 1, 4, 1) float32.  Returns (B, 2) float32 logits."""
    B, Cin, H, W = x_nchw.shape
    assert Cin == 1 and W == 1 and H == 4, "requires (B, 1, 4, 1) input"

    w_eff, b_eff = _fold_params(conv_w, conv_b, fc_w)

    # Block-diagonal expansion: W_big[r*4+h, r*2+j] = w_eff[h, j].
    w_big = jnp.kron(jnp.eye(_ROWS_PER_GROUP, dtype=jnp.float32), w_eff)  # (256, 128)
    b_big = jnp.tile(b_eff, _ROWS_PER_GROUP).reshape(1, _OUT_LANES)       # (1, 128)

    # Lane-dense packing (free reshape of contiguous row-major data).
    x2d = x_nchw.reshape(B, 4).astype(jnp.float32)
    align_rows = _ROWS_PER_GROUP * _GROUP_ALIGN            # 512 batch rows
    b_pad = _round_up(B, align_rows)
    if b_pad != B:
        # Only copies when B is not already 512-aligned (tail pad <= 511 rows).
        x2d = jnp.pad(x2d, ((0, b_pad - B), (0, 0)))
    g = b_pad // _ROWS_PER_GROUP                           # packed rows (mult. of 8)
    x_packed = x2d.reshape(g, _IN_LANES)

    # Tile sizing: cap at block_rows, force >= 2 tiles when there is enough
    # work (megacore on v7x), then rebalance so tiles are near-equal.
    tb = max(_GROUP_ALIGN, min(block_rows, g))
    num_tiles = pl.cdiv(g, tb)
    if g > _GROUP_ALIGN and num_tiles < 2:
        num_tiles = 2
    tb = max(_GROUP_ALIGN, _round_up(pl.cdiv(g, num_tiles), _GROUP_ALIGN))
    num_tiles = pl.cdiv(g, tb)

    cost = pl.CostEstimate(
        flops=2 * g * _IN_LANES * _OUT_LANES,
        transcendentals=0,
        bytes_accessed=4 * (g * _IN_LANES            # packed input
                            + _IN_LANES * _OUT_LANES  # block-diag weight
                            + _OUT_LANES              # bias
                            + g * _OUT_LANES),        # packed output
    )

    out_packed = pl.pallas_call(
        _folded_kernel,
        out_shape=jax.ShapeDtypeStruct((g, _OUT_LANES), jnp.float32),
        grid_spec=pltpu.PrefetchScalarGridSpec(
            num_scalar_prefetch=0,
            grid=(num_tiles,),
            in_specs=[
                pl.BlockSpec((tb, _IN_LANES), lambda i: (i, 0)),
                pl.BlockSpec((_IN_LANES, _OUT_LANES), lambda i: (0, 0)),
                pl.BlockSpec((1, _OUT_LANES), lambda i: (0, 0)),
            ],
            out_specs=pl.BlockSpec((tb, _OUT_LANES), lambda i: (i, 0)),
        ),
        compiler_params=pltpu.CompilerParams(
            dimension_semantics=("parallel",),
            # 8192-row tiles need ~24.3 MiB double-buffered: above v5e's
            # 16 MiB scoped default, well below v7x's 64 MiB physical VMEM.
            vmem_limit_bytes=40 * 1024 * 1024,
        ),
        cost_estimate=cost,
    )(x_packed, w_big, b_big)

    # Unpack: (g, 128) -> (b_pad, 2), drop padded batch rows.
    return out_packed.reshape(b_pad, 2)[:B]


def _reference(x_nchw, conv_w, conv_b, fc_w):
    """Pure-JAX reference mirroring the PyTorch forward."""
    B = x_nchw.shape[0]
    C = conv_w.shape[0]
    x2d = x_nchw.reshape(B, 4)
    wc = conv_w.reshape(C, 3)                                 # (C, 3)
    c0 = x2d[:, 0:3] @ wc.T + conv_b                          # (B, C)
    c1 = x2d[:, 1:4] @ wc.T + conv_b                          # (B, C)
    flat = jnp.stack([c0, c1], axis=-1).reshape(B, 2 * C)     # channel-major flatten
    return flat @ fc_w.T


if __name__ == "__main__":
    hidden_channels = 32

    key = jax.random.PRNGKey(0)
    kw, kb, kf, kx = jax.random.split(key, 4)

    # Deterministic "parameter init" (shapes match the PyTorch module).
    conv_w = 0.1 * jax.random.normal(kw, (hidden_channels, 1, 3, 1), dtype=jnp.float32)
    conv_b = 0.1 * jax.random.normal(kb, (hidden_channels,), dtype=jnp.float32)
    fc_w = 0.1 * jax.random.normal(kf, (2, hidden_channels * 2), dtype=jnp.float32)

    fwd = jax.jit(cf_conv_linear_net_pallas)

    # B = 1024: 512-aligned (no pad copy), 2 grid tiles (megacore path).
    # B = 1500: tail-pad to 1536 rows, uneven tiles (partial-block path).
    for B in (1024, 1500):
        x = jax.random.normal(jax.random.fold_in(kx, B), (B, 1, 4, 1),
                              dtype=jnp.float32)
        out = jax.block_until_ready(fwd(x, conv_w, conv_b, fc_w))
        ref = _reference(x, conv_w, conv_b, fc_w)
        assert out.shape == (B, 2)
        err = float(jnp.max(jnp.abs(out - ref)))
        assert jnp.allclose(out, ref, atol=1e-5, rtol=1e-5), err

    print("KERNEL_OK")
</pallas_src>

<mosaic_0001>
module attributes {stable_mosaic.version = 11 : i64} {
  func.func @_folded_kernel(%arg0: i32, %arg1: memref<8x256xf32, #tpu.memory_space<vmem>>, %arg2: memref<256x128xf32, #tpu.memory_space<vmem>>, %arg3: memref<1x128xf32, #tpu.memory_space<vmem>>, %arg4: memref<8x128xf32, #tpu.memory_space<vmem>>) attributes {dimension_semantics = [#tpu.dimension_semantics<parallel>], iteration_bounds = array<i64: 2>, scalar_prefetch = 0 : i64, scratch_operands = 0 : i64, tpu.core_type = #tpu.core_type<tc>, window_params = [{transform_indices = @transform_0, window_bounds = array<i64: 8, 256>}, {pipeline_mode = #tpu.pipeline_mode<synchronous>, transform_indices = @transform_1, window_bounds = array<i64: 256, 128>}, {pipeline_mode = #tpu.pipeline_mode<synchronous>, transform_indices = @transform_2, window_bounds = array<i64: 1, 128>}, {transform_indices = @transform_3, window_bounds = array<i64: 8, 128>}]} {
    %c0 = arith.constant 0 : index
    %c0_0 = arith.constant 0 : index
    %0 = vector.load %arg1[%c0, %c0_0] : memref<8x256xf32, #tpu.memory_space<vmem>>, vector<8x256xf32>
    %c0_1 = arith.constant 0 : index
    %c0_2 = arith.constant 0 : index
    %1 = vector.load %arg2[%c0_1, %c0_2] : memref<256x128xf32, #tpu.memory_space<vmem>>, vector<256x128xf32>
    %cst = arith.constant dense<0.000000e+00> : vector<8x128xf32>
    %2 = tpu.matmul %0, %1, %cst {dimension_numbers = #tpu.dot_dimension_numbers<[1], [0], [0], [1], [0, 0, 1, 1], [], []>} : vector<8x256xf32>, vector<256x128xf32>, vector<8x128xf32> -> vector<8x128xf32>
    %c0_3 = arith.constant 0 : index
    %c0_4 = arith.constant 0 : index
    %3 = vector.load %arg3[%c0_3, %c0_4] : memref<1x128xf32, #tpu.memory_space<vmem>>, vector<1x128xf32>
    %4 = vector.broadcast %3 : vector<1x128xf32> to vector<8x128xf32>
    %5 = arith.addf %2, %4 : vector<8x128xf32>
    %c0_5 = arith.constant 0 : index
    %c0_6 = arith.constant 0 : index
    %6 = vector.load %arg4[%c0_5, %c0_6] : memref<8x128xf32, #tpu.memory_space<vmem>>, vector<8x128xf32>
    tpu.vector_store %arg4[%c0_5, %c0_6], %5 {strides = array<i32>} : memref<8x128xf32, #tpu.memory_space<vmem>>, vector<8x128xf32>,
    return
  }
  func.func @transform_0(%arg0: i32) -> (i32, i32) {
    %c0_i32 = arith.constant 0 : i32
    %c0_i32_0 = arith.constant 0 : i32
    return %arg0, %c0_i32 : i32, i32
  }
  func.func @transform_1(%arg0: i32) -> (i32, i32) {
    %c0_i32 = arith.constant 0 : i32
    %c0_i32_0 = arith.constant 0 : i32
    %c0_i32_1 = arith.constant 0 : i32
    return %c0_i32, %c0_i32_0 : i32, i32
  }
  func.func @transform_2(%arg0: i32) -> (i32, i32) {
    %c0_i32 = arith.constant 0 : i32
    %c0_i32_0 = arith.constant 0 : i32
    %c0_i32_1 = arith.constant 0 : i32
    return %c0_i32, %c0_i32_0 : i32, i32
  }
  func.func @transform_3(%arg0: i32) -> (i32, i32) {
    %c0_i32 = arith.constant 0 : i32
    %c0_i32_0 = arith.constant 0 : i32
    return %arg0, %c0_i32 : i32, i32
  }
}

</mosaic_0001>

<llo_original>
// kernel: tile.6
$region0: #{tile.6}
  #allocation0 [shape = 's32[1]{0}', space=sflag, size = 0x4, scoped, tag = 'scoped memory for tile.6']
  %s0 = inlined_call_operand.vmem [shape: f32[2], index: 0, kind: input, shape index: {}]
  %s1 = inlined_call_operand.vmem [shape: f32[64,2], index: 1, kind: output, shape index: {}]
  // Predicated region
  $region2: #{tile.6} parent=0 // pred_check
    _
  $region3: #{tile.6} parent=0 // pred_check_branch
    %3 = sbr.rel (0) target = $region5
  $region4: #{tile.6} parent=0 // pred_region
    _
  $region5: #{tile.6} parent=0 // pred_fallthru
    _
  %v4 = vld [vmem:[%s0] ss:$0 sm:$0xff]
  %5 = vst [vmem:[%s1] sm:$0xff] %v4
  %s6 = scalar_lea.vmem %s1, 8
  %7 = vst [vmem:[%s6] sm:$0xff] %v4
  %s8 = scalar_lea.vmem %s1, 16
  %9 = vst [vmem:[%s8] sm:$0xff] %v4
  %s10 = scalar_lea.vmem %s1, 24
  %11 = vst [vmem:[%s10] sm:$0xff] %v4
  %s12 = scalar_lea.vmem %s1, 32
  %13 = vst [vmem:[%s12] sm:$0xff] %v4
  %s14 = scalar_lea.vmem %s1, 40
  %15 = vst [vmem:[%s14] sm:$0xff] %v4
  %s16 = scalar_lea.vmem %s1, 48
  %17 = vst [vmem:[%s16] sm:$0xff] %v4
  %s18 = scalar_lea.vmem %s1, 56
  %19 = vst [vmem:[%s18] sm:$0xff] %v4

// kernel: tile.7
$region0: #{tile.7}
  %s0 = inlined_call_operand.vmem [shape: f32[64,2], index: 0, kind: input, shape index: {}]
  %s1 = inlined_call_operand.vmem [shape: f32[1,128], index: 1, kind: output, shape index: {}]
  $region1: #{tile.7} parent=0
    #allocation0 [shape = 'u8[4096]{0}', space=vmem, size = 0x1000, scoped, tag = 'scoped mem for output reshape']
    %v2 = vld [vmem:[%s0] sm:$0x1]
    %vm3 = vcmask 15360
    %4 = vst.msk [vmem:[#allocation0] sm:$0x1] %vm3, %v2
    %s5 = scalar_lea.vmem %s0, 63
    %v6 = vld [vmem:[%s5] sm:$0x1]
    %7 = vrot.lane.b32.xlu0 %v6, 126
    %v8 = vpop.permute.xlu0 %7
    %vm9 = vcmask 1048560
    %10 = vst.msk [vmem:[#allocation0] sm:$0x1] %vm9, %v8
    %s11 = scalar_lea.vmem %s0, 62
    %v12 = vld [vmem:[%s11] sm:$0x1]
    %13 = vrot.lane.b32.xlu0 %v12, 124
    %v14 = vpop.permute.xlu0 %13
    %vm15 = vcmask 1032160
    %16 = vst.msk [vmem:[#allocation0] sm:$0x1] %vm15, %v14
    %s17 = scalar_lea.vmem %s0, 61
    %v18 = vld [vmem:[%s17] sm:$0x1]
    %19 = vrot.lane.b32.xlu0 %v18, 122
    %v20 = vpop.permute.xlu0 %19
    %vm21 = vcmask 1015760
    %22 = vst.msk [vmem:[#allocation0] sm:$0x1] %vm21, %v20
    %s23 = scalar_lea.vmem %s0, 60
    %v24 = vld [vmem:[%s23] sm:$0x1]
    %25 = vrot.lane.b32.xlu0 %v24, 120
    %v26 = vpop.permute.xlu0 %25
    %vm27 = vcmask 999360
    %28 = vst.msk [vmem:[#allocation0] sm:$0x1] %vm27, %v26
    %s29 = scalar_lea.vmem %s0, 59
    %v30 = vld [vmem:[%s29] sm:$0x1]
    %31 = vrot.lane.b32.xlu0 %v30, 118
    %v32 = vpop.permute.xlu0 %31
    %vm33 = vcmask 982960
    %34 = vst.msk [vmem:[#allocation0] sm:$0x1] %vm33, %v32
    %s35 = scalar_lea.vmem %s0, 58
    %v36 = vld [vmem:[%s35] sm:$0x1]
    %37 = vrot.lane.b32.xlu0 %v36, 116
    %v38 = vpop.permute.xlu0 %37
    %vm39 = vcmask 966560
    %40 = vst.msk [vmem:[#allocation0] sm:$0x1] %vm39, %v38
    %s41 = scalar_lea.vmem %s0, 57
    %v42 = vld [vmem:[%s41] sm:$0x1]
    %43 = vrot.lane.b32.xlu0 %v42, 114
    %v44 = vpop.permute.xlu0 %43
    %vm45 = vcmask 950160
    %46 = vst.msk [vmem:[#allocation0] sm:$0x1] %vm45, %v44
    %s47 = scalar_lea.vmem %s0, 56
    %v48 = vld [vmem:[%s47] sm:$0x1]
    %49 = vrot.lane.b32.xlu0 %v48, 112
    %v50 = vpop.permute.xlu0 %49
    %vm51 = vcmask 933760
    %52 = vst.msk [vmem:[#allocation0] sm:$0x1] %vm51, %v50
    %s53 = scalar_lea.vmem %s0, 55
    %v54 = vld [vmem:[%s53] sm:$0x1]
    %55 = vrot.lane.b32.xlu0 %v54, 110
    %v56 = vpop.permute.xlu0 %55
    %vm57 = vcmask 917360
    %58 = vst.msk [vmem:[#allocation0] sm:$0x1] %vm57, %v56
    %s59 = scalar_lea.vmem %s0, 54
    %v60 = vld [vmem:[%s59] sm:$0x1]
    %61 = vrot.lane.b32.xlu0 %v60, 108
    %v62 = vpop.permute.xlu0 %61
    %vm63 = vcmask 900960
    %64 = vst.msk [vmem:[#allocation0] sm:$0x1] %vm63, %v62
    %s65 = scalar_lea.vmem %s0, 53
    %v66 = vld [vmem:[%s65] sm:$0x1]
    %67 = vrot.lane.b32.xlu0 %v66, 106
    %v68 = vpop.permute.xlu0 %67
    %vm69 = vcmask 884560
    %70 = vst.msk [vmem:[#allocation0] sm:$0x1] %vm69, %v68
    %s71 = scalar_lea.vmem %s0, 52
    %v72 = vld [vmem:[%s71] sm:$0x1]
    %73 = vrot.lane.b32.xlu0 %v72, 104
    %v74 = vpop.permute.xlu0 %73
    %vm75 = vcmask 868160
    %76 = vst.msk [vmem:[#allocation0] sm:$0x1] %vm75, %v74
    %s77 = scalar_lea.vmem %s0, 51
    %v78 = vld [vmem:[%s77] sm:$0x1]
    %79 = vrot.lane.b32.xlu0 %v78, 102
    %v80 = vpop.permute.xlu0 %79
    %vm81 = vcmask 851760
    %82 = vst.msk [vmem:[#allocation0] sm:$0x1] %vm81, %v80
    %s83 = scalar_lea.vmem %s0, 50
    %v84 = vld [vmem:[%s83] sm:$0x1]
    %85 = vrot.lane.b32.xlu0 %v84, 100
    %v86 = vpop.permute.xlu0 %85
    %vm87 = vcmask 835360
    %88 = vst.msk [vmem:[#allocation0] sm:$0x1] %vm87, %v86
    %s89 = scalar_lea.vmem %s0, 49
    %v90 = vld [vmem:[%s89] sm:$0x1]
    %91 = vrot.lane.b32.xlu0 %v90, 98
    %v92 = vpop.permute.xlu0 %91
    %vm93 = vcmask 818960
    %94 = vst.msk [vmem:[#allocation0] sm:$0x1] %vm93, %v92
    %s95 = scalar_lea.vmem %s0, 48
    %v96 = vld [vmem:[%s95] sm:$0x1]
    %97 = vrot.lane.b32.xlu0 %v96, 96
    %v98 = vpop.permute.xlu0 %97
    %vm99 = vcmask 802560
    %100 = vst.msk [vmem:[#allocation0] sm:$0x1] %vm99, %v98
    %s101 = scalar_lea.vmem %s0, 47
    %v102 = vld [vmem:[%s101] sm:$0x1]
    %103 = vrot.lane.b32.xlu0 %v102, 94
    %v104 = vpop.permute.xlu0 %103
    %vm105 = vcmask 786160
    %106 = vst.msk [vmem:[#allocation0] sm:$0x1] %vm105, %v104
    %s107 = scalar_lea.vmem %s0, 46
    %v108 = vld [vmem:[%s107] sm:$0x1]
    %109 = vrot.lane.b32.xlu0 %v108, 92
    %v110 = vpop.permute.xlu0 %109
    %vm111 = vcmask 769760
    %112 = vst.msk [vmem:[#allocation0] sm:$0x1] %vm111, %v110
    %s113 = scalar_lea.vmem %s0, 45
    %v114 = vld [vmem:[%s113] sm:$0x1]
    %115 = vrot.lane.b32.xlu0 %v114, 90
    %v116 = vpop.permute.xlu0 %115
    %vm117 = vcmask 753360
    %118 = vst.msk [vmem:[#allocation0] sm:$0x1] %vm117, %v116
    %s119 = scalar_lea.vmem %s0, 44
    %v120 = vld [vmem:[%s119] sm:$0x1]
    %121 = vrot.lane.b32.xlu0 %v120, 88
    %v122 = vpop.permute.xlu0 %121
    %vm123 = vcmask 736960
    %124 = vst.msk [vmem:[#allocation0] sm:$0x1] %vm123, %v122
    %s125 = scalar_lea.vmem %s0, 43
    %v126 = vld [vmem:[%s125] sm:$0x1]
    %127 = vrot.lane.b32.xlu0 %v126, 86
    %v128 = vpop.permute.xlu0 %127
    %vm129 = vcmask 720560
    %130 = vst.msk [vmem:[#allocation0] sm:$0x1] %vm129, %v128
    %s131 = scalar_lea.vmem %s0, 42
    %v132 = vld [vmem:[%s131] sm:$0x1]
    %133 = vrot.lane.b32.xlu0 %v132, 84
    %v134 = vpop.permute.xlu0 %133
    %vm135 = vcmask 704160
    %136 = vst.msk [vmem:[#allocation0] sm:$0x1] %vm135, %v134
    %s137 = scalar_lea.vmem %s0, 41
    %v138 = vld [vmem:[%s137] sm:$0x1]
    %139 = vrot.lane.b32.xlu0 %v138, 82
    %v140 = vpop.permute.xlu0 %139
    %vm141 = vcmask 687760
    %142 = vst.msk [vmem:[#allocation0] sm:$0x1] %vm141, %v140
    %s143 = scalar_lea.vmem %s0, 40
    %v144 = vld [vmem:[%s143] sm:$0x1]
    %145 = vrot.lane.b32.xlu0 %v144, 80
    %v146 = vpop.permute.xlu0 %145
    %vm147 = vcmask 671360
    %148 = vst.msk [vmem:[#allocation0] sm:$0x1] %vm147, %v146
    %s149 = scalar_lea.vmem %s0, 39
    %v150 = vld [vmem:[%s149] sm:$0x1]
    %151 = vrot.lane.b32.xlu0 %v150, 78
    %v152 = vpop.permute.xlu0 %151
    %vm153 = vcmask 654960
    %154 = vst.msk [vmem:[#allocation0] sm:$0x1] %vm153, %v152
    %s155 = scalar_lea.vmem %s0, 38
    %v156 = vld [vmem:[%s155] sm:$0x1]
    %157 = vrot.lane.b32.xlu0 %v156, 76
    %v158 = vpop.permute.xlu0 %157
    %vm159 = vcmask 638560
    %160 = vst.msk [vmem:[#allocation0] sm:$0x1] %vm159, %v158
    %s161 = scalar_lea.vmem %s0, 37
    %v162 = vld [vmem:[%s161] sm:$0x1]
    %163 = vrot.lane.b32.xlu0 %v162, 74
    %v164 = vpop.permute.xlu0 %163
    %vm165 = vcmask 622160
    %166 = vst.msk [vmem:[#allocation0] sm:$0x1] %vm165, %v164
    %s167 = scalar_lea.vmem %s0, 36
    %v168 = vld [vmem:[%s167] sm:$0x1]
    %169 = vrot.lane.b32.xlu0 %v168, 72
    %v170 = vpop.permute.xlu0 %169
    %vm171 = vcmask 605760
    %172 = vst.msk [vmem:[#allocation0] sm:$0x1] %vm171, %v170
    %s173 = scalar_lea.vmem %s0, 35
    %v174 = vld [vmem:[%s173] sm:$0x1]
    %175 = vrot.lane.b32.xlu0 %v174, 70
    %v176 = vpop.permute.xlu0 %175
    %vm177 = vcmask 589360
    %178 = vst.msk [vmem:[#allocation0] sm:$0x1] %vm177, %v176
    %s179 = scalar_lea.vmem %s0, 34
    %v180 = vld [vmem:[%s179] sm:$0x1]
    %181 = vrot.lane.b32.xlu0 %v180, 68
    %v182 = vpop.permute.xlu0 %181
    %vm183 = vcmask 572960
    %184 = vst.msk [vmem:[#allocation0] sm:$0x1] %vm183, %v182
    %s185 = scalar_lea.vmem %s0, 33
    %v186 = vld [vmem:[%s185] sm:$0x1]
    %187 = vrot.lane.b32.xlu0 %v186, 66
    %v188 = vpop.permute.xlu0 %187
    %vm189 = vcmask 556560
    %190 = vst.msk [vmem:[#allocation0] sm:$0x1] %vm189, %v188
    %s191 = scalar_lea.vmem %s0, 32
    %v192 = vld [vmem:[%s191] sm:$0x1]
    %193 = vrot.lane.b32.xlu0 %v192, 64
    %v194 = vpop.permute.xlu0 %193
    %vm195 = vcmask 540160
    %196 = vst.msk [vmem:[#allocation0] sm:$0x1] %vm195, %v194
    %s197 = scalar_lea.vmem %s0, 31
    %v198 = vld [vmem:[%s197] sm:$0x1]
    %199 = vrot.lane.b32.xlu0 %v198, 62
    %v200 = vpop.permute.xlu0 %199
    %vm201 = vcmask 523760
    %202 = vst.msk [vmem:[#allocation0] sm:$0x1] %vm201, %v200
    %s203 = scalar_lea.vmem %s0, 30
    %v204 = vld [vmem:[%s203] sm:$0x1]
    %205 = vrot.lane.b32.xlu0 %v204, 60
    %v206 = vpop.permute.xlu0 %205
    %vm207 = vcmask 507360
    %208 = vst.msk [vmem:[#allocation0] sm:$0x1] %vm207, %v206
    %s209 = scalar_lea.vmem %s0, 29
    %v210 = vld [vmem:[%s209] sm:$0x1]
    %211 = vrot.lane.b32.xlu0 %v210, 58
    %v212 = vpop.permute.xlu0 %211
    %vm213 = vcmask 490960
    %214 = vst.msk [vmem:[#allocation0] sm:$0x1] %vm213, %v212
    %s215 = scalar_lea.vmem %s0, 28
    %v216 = vld [vmem:[%s215] sm:$0x1]
    %217 = vrot.lane.b32.xlu0 %v216, 56
    %v218 = vpop.permute.xlu0 %217
    %vm219 = vcmask 474560
    %220 = vst.msk [vmem:[#allocation0] sm:$0x1] %vm219, %v218
    %s221 = scalar_lea.vmem %s0, 27
    %v222 = vld [vmem:[%s221] sm:$0x1]
    %223 = vrot.lane.b32.xlu0 %v222, 54
    %v224 = vpop.permute.xlu0 %223
    %vm225 = vcmask 458160
    %226 = vst.msk [vmem:[#allocation0] sm:$0x1] %vm225, %v224
    %s227 = scalar_lea.vmem %s0, 26
    %v228 = vld [vmem:[%s227] sm:$0x1]
    %229 = vrot.lane.b32.xlu0 %v228, 52
    %v230 = vpop.permute.xlu0 %229
    %vm231 = vcmask 441760
    %232 = vst.msk [vmem:[#allocation0] sm:$0x1] %vm231, %v230
    %s233 = scalar_lea.vmem %s0, 25
    %v234 = vld [vmem:[%s233] sm:$0x1]
    %235 = vrot.lane.b32.xlu0 %v234, 50
    %v236 = vpop.permute.xlu0 %235
    %vm237 = vcmask 425360
    %238 = vst.msk [vmem:[#allocation0] sm:$0x1] %vm237, %v236
    %s239 = scalar_lea.vmem %s0, 24
    %v240 = vld [vmem:[%s239] sm:$0x1]
    %241 = vrot.lane.b32.xlu0 %v240, 48
    %v242 = vpop.permute.xlu0 %241
    %vm243 = vcmask 408960
    %244 = vst.msk [vmem:[#allocation0] sm:$0x1] %vm243, %v242
    %s245 = scalar_lea.vmem %s0, 23
    %v246 = vld [vmem:[%s245] sm:$0x1]
    %247 = vrot.lane.b32.xlu0 %v246, 46
    %v248 = vpop.permute.xlu0 %247
    %vm249 = vcmask 392560
    %250 = vst.msk [vmem:[#allocation0] sm:$0x1] %vm249, %v248
    %s251 = scalar_lea.vmem %s0, 22
    %v252 = vld [vmem:[%s251] sm:$0x1]
    %253 = vrot.lane.b32.xlu0 %v252, 44
    %v254 = vpop.permute.xlu0 %253
    %vm255 = vcmask 376160
    %256 = vst.msk [vmem:[#allocation0] sm:$0x1] %vm255, %v254
    %s257 = scalar_lea.vmem %s0, 21
    %v258 = vld [vmem:[%s257] sm:$0x1]
    %259 = vrot.lane.b32.xlu0 %v258, 42
    %v260 = vpop.permute.xlu0 %259
    %vm261 = vcmask 359760
    %262 = vst.msk [vmem:[#allocation0] sm:$0x1] %vm261, %v260
    %s263 = scalar_lea.vmem %s0, 20
    %v264 = vld [vmem:[%s263] sm:$0x1]
    %265 = vrot.lane.b32.xlu0 %v264, 40
    %v266 = vpop.permute.xlu0 %265
    %vm267 = vcmask 343360
    %268 = vst.msk [vmem:[#allocation0] sm:$0x1] %vm267, %v266
    %s269 = scalar_lea.vmem %s0, 19
    %v270 = vld [vmem:[%s269] sm:$0x1]
    %271 = vrot.lane.b32.xlu0 %v270, 38
    %v272 = vpop.permute.xlu0 %271
    %vm273 = vcmask 326960
    %274 = vst.msk [vmem:[#allocation0] sm:$0x1] %vm273, %v272
    %s275 = scalar_lea.vmem %s0, 18
    %v276 = vld [vmem:[%s275] sm:$0x1]
    %277 = vrot.lane.b32.xlu0 %v276, 36
    %v278 = vpop.permute.xlu0 %277
    %vm279 = vcmask 310560
    %280 = vst.msk [vmem:[#allocation0] sm:$0x1] %vm279, %v278
    %s281 = scalar_lea.vmem %s0, 17
    %v282 = vld [vmem:[%s281] sm:$0x1]
    %283 = vrot.lane.b32.xlu0 %v282, 34
    %v284 = vpop.permute.xlu0 %283
    %vm285 = vcmask 294160
    %286 = vst.msk [vmem:[#allocation0] sm:$0x1] %vm285, %v284
    %s287 = scalar_lea.vmem %s0, 16
    %v288 = vld [vmem:[%s287] sm:$0x1]
    %289 = vrot.lane.b32.xlu0 %v288, 32
    %v290 = vpop.permute.xlu0 %289
    %vm291 = vcmask 277760
    %292 = vst.msk [vmem:[#allocation0] sm:$0x1] %vm291, %v290
    %s293 = scalar_lea.vmem %s0, 15
    %v294 = vld [vmem:[%s293] sm:$0x1]
    %295 = vrot.lane.b32.xlu0 %v294, 30
    %v296 = vpop.permute.xlu0 %295
    %vm297 = vcmask 261360
    %298 = vst.msk [vmem:[#allocation0] sm:$0x1] %vm297, %v296
    %s299 = scalar_lea.vmem %s0, 14
    %v300 = vld [vmem:[%s299] sm:$0x1]
    %301 = vrot.lane.b32.xlu0 %v300, 28
    %v302 = vpop.permute.xlu0 %301
    %vm303 = vcmask 244960
    %304 = vst.msk [vmem:[#allocation0] sm:$0x1] %vm303, %v302
    %s305 = scalar_lea.vmem %s0, 13
    %v306 = vld [vmem:[%s305] sm:$0x1]
    %307 = vrot.lane.b32.xlu0 %v306, 26
    %v308 = vpop.permute.xlu0 %307
    %vm309 = vcmask 228560
    %310 = vst.msk [vmem:[#allocation0] sm:$0x1] %vm309, %v308
    %s311 = scalar_lea.vmem %s0, 12
    %v312 = vld [vmem:[%s311] sm:$0x1]
    %313 = vrot.lane.b32.xlu0 %v312, 24
    %v314 = vpop.permute.xlu0 %313
    %vm315 = vcmask 212160
    %316 = vst.msk [vmem:[#allocation0] sm:$0x1] %vm315, %v314
    %s317 = scalar_lea.vmem %s0, 11
    %v318 = vld [vmem:[%s317] sm:$0x1]
    %319 = vrot.lane.b32.xlu0 %v318, 22
    %v320 = vpop.permute.xlu0 %319
    %vm321 = vcmask 195760
    %322 = vst.msk [vmem:[#allocation0] sm:$0x1] %vm321, %v320
    %s323 = scalar_lea.vmem %s0, 10
    %v324 = vld [vmem:[%s323] sm:$0x1]
    %325 = vrot.lane.b32.xlu0 %v324, 20
    %v326 = vpop.permute.xlu0 %325
    %vm327 = vcmask 179360
    %328 = vst.msk [vmem:[#allocation0] sm:$0x1] %vm327, %v326
    %s329 = scalar_lea.vmem %s0, 9
    %v330 = vld [vmem:[%s329] sm:$0x1]
    %331 = vrot.lane.b32.xlu0 %v330, 18
    %v332 = vpop.permute.xlu0 %331
    %vm333 = vcmask 162960
    %334 = vst.msk [vmem:[#allocation0] sm:$0x1] %vm333, %v332
    %s335 = scalar_lea.vmem %s0, 8
    %v336 = vld [vmem:[%s335] sm:$0x1]
    %337 = vrot.lane.b32.xlu0 %v336, 16
    %v338 = vpop.permute.xlu0 %337
    %vm339 = vcmask 146560
    %340 = vst.msk [vmem:[#allocation0] sm:$0x1] %vm339, %v338
    %s341 = scalar_lea.vmem %s0, 7
    %v342 = vld [vmem:[%s341] sm:$0x1]
    %343 = vrot.lane.b32.xlu0 %v342, 14
    %v344 = vpop.permute.xlu0 %343
    %vm345 = vcmask 130160
    %346 = vst.msk [vmem:[#allocation0] sm:$0x1] %vm345, %v344
    %s347 = scalar_lea.vmem %s0, 6
    %v348 = vld [vmem:[%s347] sm:$0x1]
    %349 = vrot.lane.b32.xlu0 %v348, 12
    %v350 = vpop.permute.xlu0 %349
    %vm351 = vcmask 113760
    %352 = vst.msk [vmem:[#allocation0] sm:$0x1] %vm351, %v350
    %s353 = scalar_lea.vmem %s0, 5
    %v354 = vld [vmem:[%s353] sm:$0x1]
    %355 = vrot.lane.b32.xlu0 %v354, 10
    %v356 = vpop.permute.xlu0 %355
    %vm357 = vcmask 97360
    %358 = vst.msk [vmem:[#allocation0] sm:$0x1] %vm357, %v356
    %s359 = scalar_lea.vmem %s0, 4
    %v360 = vld [vmem:[%s359] sm:$0x1]
    %361 = vrot.lane.b32.xlu0 %v360, 8
    %v362 = vpop.permute.xlu0 %361
    %vm363 = vcmask 80960
    %364 = vst.msk [vmem:[#allocation0] sm:$0x1] %vm363, %v362
    %s365 = scalar_lea.vmem %s0, 3
    %v366 = vld [vmem:[%s365] sm:$0x1]
    %367 = vrot.lane.b32.xlu0 %v366, 6
    %v368 = vpop.permute.xlu0 %367
    %vm369 = vcmask 64560
    %370 = vst.msk [vmem:[#allocation0] sm:$0x1] %vm369, %v368
    %s371 = scalar_lea.vmem %s0, 2
    %v372 = vld [vmem:[%s371] sm:$0x1]
    %373 = vrot.lane.b32.xlu0 %v372, 4
    %v374 = vpop.permute.xlu0 %373
    %vm375 = vcmask 48160
    %376 = vst.msk [vmem:[#allocation0] sm:$0x1] %vm375, %v374
    %s377 = scalar_lea.vmem %s0, 1
    %v378 = vld [vmem:[%s377] sm:$0x1]
    %379 = vrot.lane.b32.xlu0 %v378, 2
    %v380 = vpop.permute.xlu0 %379
    %vm381 = vcmask 31760
    %382 = vst.msk [vmem:[#allocation0] sm:$0x1] %vm381, %v380
    %s384 = ssub.s32 2, 1
    %v385 = vld [vmem:[#allocation0] sm:%s384]
    %s387 = ssub.s32 2, 1
    %388 = vst [vmem:[%s1] sm:%s387] %v385

// kernel: cf_conv_linear_net_pallas.1
$region0: #{cf_conv_linear_net_pallas.1}
  #allocation0 [shape = 'u32[]', space=smem, size = 0x4, offset = 0x4, fixed_abs, tag = 'smem constant byte address 0x4 - core index']
  #allocation1 [shape = 'u32[72,128]{1,0:T(1,128)}', space=vmem, size = 0x9000, scoped, tag = 'internal scratch']
  %s0 = inlined_call_operand.vmem [shape: f32[16,256], index: 0, kind: input, shape index: {}]
  %s1 = inlined_call_operand.vmem [shape: f32[256,128], index: 1, kind: input, shape index: {}]
  %s2 = inlined_call_operand.vmem [shape: f32[1,128], index: 2, kind: input, shape index: {}]
  %s3 = inlined_call_operand.vmem [shape: f32[16,128], index: 3, kind: output, shape index: {}]
  %s4 = sld [smem:[#allocation0]]
  $region45: #{cf_conv_linear_net_pallas.1} parent=0
    _
  %s6 = ssub.s32 1, %s4
  %s7 = scalar_select 0, %s6, %s4
  loop: start=0, step=1, limit=4
  $region2: #{cf_conv_linear_net_pallas.1} parent=0 // loop_pre_header
    _
  $region3: #{cf_conv_linear_net_pallas.1} parent=0 // loop_header
    %s9 = sphi 0, %s13
    %p10 = scmp.ge.s32.totalorder %s9, 4
    %s19 = sphi 0, %s21
    %s22 = sphi 0, %s19
    %s23 = sphi 0, %s22
    %s39 = sphi 0, %s23
    %s43 = sphi 0, %s43
    %s45 = sphi 0, %s43
    %s46 = sphi 0, %s45
    %s60 = sphi 0, %s46
    %s64 = sphi 0, %s64
    %s66 = sphi 0, %s64
    %s67 = sphi 0, %s66
    %s81 = sphi 0, %s67
    %s87 = sphi 0, %s89
    %s90 = sphi 0, %s87
    %s91 = sphi 0, %s90
    %s107 = sphi 0, %s91
  $region4: #{cf_conv_linear_net_pallas.1} parent=0 // loop_header_branch
    %12 = sbr.rel (%p10) target = $region8
  $region5: #{cf_conv_linear_net_pallas.1} parent=0 // loop_body
    %s14 = ssub.s32 %s9, 1
    %s15 = ssub.s32 %s9, 2
    %s16 = sadd.s32 %s9, 1
    %s17 = ssub.s32 %s9, %s16
    %p18 = scmp.eq.s32.totalorder %s17, 0
    %s20 = sadd.s32 %s19, 1
    %s21 = scalar_select %p18, %s19, %s20
    %p24 = pneg %p18
    %p25 = scmp.eq.s32.totalorder %s9, 1
    %p26 = por %p24, %p25
    %p27 = scmp.ne.s32.totalorder %s19, %s22
    %p28 = scmp.eq.s32.totalorder %s9, 0
    %p29 = por %p27, %p28
    %p30 = scmp.ne.s32.totalorder %s19, %s22
    %p31 = scmp.eq.s32.totalorder %s14, 1
    %p32 = por %p30, %p31
    %p33 = scmp.ne.s32.totalorder %s22, %s23
    %p34 = scmp.eq.s32.totalorder %s14, 0
    %p35 = por %p33, %p34
    %p36 = scmp.ne.s32.totalorder %s22, %s23
    %p37 = scmp.eq.s32.totalorder %s15, 1
    %p38 = por %p36, %p37
    %p40 = scmp.ne.s32.totalorder %s23, %s39
    %p41 = scmp.eq.s32.totalorder %s15, 0
    %p42 = por %p40, %p41
    %s44 = sadd.s32 %s43, 1
    %p47 = scmp.eq.s32.totalorder %s9, 1
    %p48 = scmp.ne.s32.totalorder %s43, %s45
    %p49 = scmp.eq.s32.totalorder %s9, 0
    %p50 = por %p48, %p49
    %p51 = scmp.ne.s32.totalorder %s43, %s45
    %p52 = scmp.eq.s32.totalorder %s14, 1
    %p53 = por %p51, %p52
    %p54 = scmp.ne.s32.totalorder %s45, %s46
    %p55 = scmp.eq.s32.totalorder %s14, 0
    %p56 = por %p54, %p55
    %p57 = scmp.ne.s32.totalorder %s45, %s46
    %p58 = scmp.eq.s32.totalorder %s15, 1
    %p59 = por %p57, %p58
    %p61 = scmp.ne.s32.totalorder %s46, %s60
    %p62 = scmp.eq.s32.totalorder %s15, 0
    %p63 = por %p61, %p62
    %s65 = sadd.s32 %s64, 1
    %p68 = scmp.eq.s32.totalorder %s9, 1
    %p69 = scmp.ne.s32.totalorder %s64, %s66
    %p70 = scmp.eq.s32.totalorder %s9, 0
    %p71 = por %p69, %p70
    %p72 = scmp.ne.s32.totalorder %s64, %s66
    %p73 = scmp.eq.s32.totalorder %s14, 1
    %p74 = por %p72, %p73
    %p75 = scmp.ne.s32.totalorder %s66, %s67
    %p76 = scmp.eq.s32.totalorder %s14, 0
    %p77 = por %p75, %p76
    %p78 = scmp.ne.s32.totalorder %s66, %s67
    %p79 = scmp.eq.s32.totalorder %s15, 1
    %p80 = por %p78, %p79
    %p82 = scmp.ne.s32.totalorder %s67, %s81
    %p83 = scmp.eq.s32.totalorder %s15, 0
    %p84 = por %p82, %p83
    %s85 = ssub.s32 %s9, %s16
    %p86 = scmp.eq.s32.totalorder %s85, 0
    %s88 = sadd.s32 %s87, 1
    %s89 = scalar_select %p86, %s87, %s88
    %p92 = pneg %p86
    %p93 = scmp.eq.s32.totalorder %s9, 1
    %p94 = por %p92, %p93
    %p95 = scmp.ne.s32.totalorder %s87, %s90
    %p96 = scmp.eq.s32.totalorder %s9, 0
    %p97 = por %p95, %p96
    %p98 = scmp.ne.s32.totalorder %s87, %s90
    %p99 = scmp.eq.s32.totalorder %s14, 1
    %p100 = por %p98, %p99
    %p101 = scmp.ne.s32.totalorder %s90, %s91
    %p102 = scmp.eq.s32.totalorder %s14, 0
    %p103 = por %p101, %p102
    %p104 = scmp.ne.s32.totalorder %s90, %s91
    %p105 = scmp.eq.s32.totalorder %s15, 1
    %p106 = por %p104, %p105
    %p108 = scmp.ne.s32.totalorder %s91, %s107
    %p109 = scmp.eq.s32.totalorder %s15, 0
    %p110 = por %p108, %p109
    %p111 = scmp.le.s32.totalorder 1, %s9
    %p112 = scmp.lt.s32.totalorder %s9, 3
    %p113 = pnand %p111, %p112
    %p114 = pneg %p113
    // Predicated region
    $region9: #{cf_conv_linear_net_pallas.1} parent=5 // pred_check
      _
    $region10: #{cf_conv_linear_net_pallas.1} parent=5 // pred_check_branch
      %116 = sbr.rel (%p113) target = $region12
    $region11: #{cf_conv_linear_net_pallas.1} parent=5 // pred_region
      %s117 = ssub.s32 %s9, 1
      // Predicated region
      $region13: #{cf_conv_linear_net_pallas.1} parent=11 // pred_check
        %p118 = pneg %p56
      $region14: #{cf_conv_linear_net_pallas.1} parent=11 // pred_check_branch
        %120 = sbr.rel (%p118) target = $region16
      $region15: #{cf_conv_linear_net_pallas.1} parent=11 // pred_region
        _
      $region16: #{cf_conv_linear_net_pallas.1} parent=11 // pred_fallthru
        _
      // Predicated region
      $region17: #{cf_conv_linear_net_pallas.1} parent=11 // pred_check
        %p121 = pneg %p77
      $region18: #{cf_conv_linear_net_pallas.1} parent=11 // pred_check_branch
        %123 = sbr.rel (%p121) target = $region20
      $region19: #{cf_conv_linear_net_pallas.1} parent=11 // pred_region
        _
      $region20: #{cf_conv_linear_net_pallas.1} parent=11 // pred_fallthru
        _
    $region12: #{cf_conv_linear_net_pallas.1} parent=5 // pred_fallthru
      _
    %p124 = scmp.lt.s32.totalorder %s9, 2
    // Predicated region
    $region21: #{cf_conv_linear_net_pallas.1} parent=5 // pred_check
      %p125 = pneg %p124
    $region22: #{cf_conv_linear_net_pallas.1} parent=5 // pred_check_branch
      %127 = sbr.rel (%p125) target = $region24
    $region23: #{cf_conv_linear_net_pallas.1} parent=5 // pred_region
      // Predicated region
      $region25: #{cf_conv_linear_net_pallas.1} parent=23 // pred_check
        %p128 = pneg %p29
      $region26: #{cf_conv_linear_net_pallas.1} parent=23 // pred_check_branch
        %130 = sbr.rel (%p128) target = $region28
      $region27: #{cf_conv_linear_net_pallas.1} parent=23 // pred_region
        %p131 = scmp.lt.s32.totalorder %s9, 1
        %s132 = scalar_select %p131, %s9, 1
        %s133 = smul.addr %s132, 2
        %s134 = smul.addr %s133, 8
        %s135 = scalar_lea.vmem %s0, %s134
      $region28: #{cf_conv_linear_net_pallas.1} parent=23 // pred_fallthru
        _
    $region24: #{cf_conv_linear_net_pallas.1} parent=5 // pred_fallthru
      _
    %p136 = scmp.le.s32.totalorder 1, %s9
    %p137 = scmp.lt.s32.totalorder %s9, 3
    %p138 = pnand %p136, %p137
    %p139 = pneg %p138
    // Predicated region
    $region29: #{cf_conv_linear_net_pallas.1} parent=5 // pred_check
      _
    $region30: #{cf_conv_linear_net_pallas.1} parent=5 // pred_check_branch
      %141 = sbr.rel (%p138) target = $region32
    $region31: #{cf_conv_linear_net_pallas.1} parent=5 // pred_region
      %s142 = ssub.s32 %s9, 1
      %p143 = scmp.lt.s32.totalorder %s14, 1
      %s144 = scalar_select %p143, %s14, 1
      %s145 = smul.addr %s144, 2
      %s146 = smul.addr %s145, 8
      %s147 = scalar_lea.vmem %s0, %s146
      %p148 = pneg %p35
      %p149 = pneg %p32
      %p150 = pneg %p56
      %p151 = pneg %p53
      %p152 = pneg %p77
      %p153 = pneg %p74
      %p154 = pneg %p103
      %p155 = pneg %p100
      %p156 = scmp.lt.s32.totalorder %s14, 1
      %s157 = scalar_select %p156, %s14, 1
      %s158 = smul.addr %s157, 8
      %s159 = scalar_lea.vmem %s3, %s158
      %p160 = scmp.lt.s32.totalorder %s14, 1
      %s161 = scalar_select %p160, %s14, 1
      %s162 = smul.addr %s161, 2
      %s163 = smul.addr %s162, 8
      %s164 = scalar_lea.vmem %s0, %s163
      %p165 = scmp.lt.s32.totalorder %s14, 1
      %s166 = scalar_select %p165, %s14, 1
      %s167 = smul.addr %s166, 8
      %s168 = scalar_lea.vmem %s3, %s167
      %v169 = vld [vmem:[%s164] sm:$0xff]
      %v170 = vld [vmem:[%s164 + $0x8] sm:$0xff]
      %v171 = vld [vmem:[%s1] sm:$0xff]
      %v172 = vld [vmem:[%s1 + $0x8] sm:$0xff]
      %v173 = vld [vmem:[%s1 + $0x10] sm:$0xff]
      %v174 = vld [vmem:[%s1 + $0x18] sm:$0xff]
      %v175 = vld [vmem:[%s1 + $0x20] sm:$0xff]
      %v176 = vld [vmem:[%s1 + $0x28] sm:$0xff]
      %v177 = vld [vmem:[%s1 + $0x30] sm:$0xff]
      %v178 = vld [vmem:[%s1 + $0x38] sm:$0xff]
      %v179 = vld [vmem:[%s1 + $0x40] sm:$0xff]
      %v180 = vld [vmem:[%s1 + $0x48] sm:$0xff]
      %v181 = vld [vmem:[%s1 + $0x50] sm:$0xff]
      %v182 = vld [vmem:[%s1 + $0x58] sm:$0xff]
      %v183 = vld [vmem:[%s1 + $0x60] sm:$0xff]
      %v184 = vld [vmem:[%s1 + $0x68] sm:$0xff]
      %v185 = vld [vmem:[%s1 + $0x70] sm:$0xff]
      %v186 = vld [vmem:[%s1 + $0x78] sm:$0xff]
      %v187 = vld [vmem:[%s1 + $0x80] sm:$0xff]
      %v188 = vld [vmem:[%s1 + $0x88] sm:$0xff]
      %v189 = vld [vmem:[%s1 + $0x90] sm:$0xff]
      %v190 = vld [vmem:[%s1 + $0x98] sm:$0xff]
      %v191 = vld [vmem:[%s1 + $0xa0] sm:$0xff]
      %v192 = vld [vmem:[%s1 + $0xa8] sm:$0xff]
      %v193 = vld [vmem:[%s1 + $0xb0] sm:$0xff]
      %v194 = vld [vmem:[%s1 + $0xb8] sm:$0xff]
      %v195 = vld [vmem:[%s1 + $0xc0] sm:$0xff]
      %v196 = vld [vmem:[%s1 + $0xc8] sm:$0xff]
      %v197 = vld [vmem:[%s1 + $0xd0] sm:$0xff]
      %v198 = vld [vmem:[%s1 + $0xd8] sm:$0xff]
      %v199 = vld [vmem:[%s1 + $0xe0] sm:$0xff]
      %v200 = vld [vmem:[%s1 + $0xe8] sm:$0xff]
      %v201 = vld [vmem:[%s1 + $0xf0] sm:$0xff]
      %v202 = vld [vmem:[%s1 + $0xf8] sm:$0xff]
      %v203 = vld [vmem:[%s2] sm:$0x1]
      %v205 = vperm.slane %v203, 0
      %207 = vmatpush.msra.mxu0 %v186
      %208 = vmatpush.msra.mxu0 %v185
      %209 = vmatpush.msra.mxu0 %v184
      %210 = vmatpush.msra.mxu0 %v183
      %211 = vmatpush.msra.mxu0 %v182
      %212 = vmatpush.msra.mxu0 %v181
      %213 = vmatpush.msra.mxu0 %v180
      %214 = vmatpush.msra.mxu0 %v179
      %215 = vmatpush.msra.mxu0 %v178
      %216 = vmatpush.msra.mxu0 %v177
      %217 = vmatpush.msra.mxu0 %v176
      %218 = vmatpush.msra.mxu0 %v175
      %219 = vmatpush.msra.mxu0 %v174
      %220 = vmatpush.msra.mxu0 %v173
      %221 = vmatpush.msra.mxu0 %v172
      %222 = vmatpush.msra.mxu0 %v171
      %223 = vmatmul.f32.gmra.mxu0 %v169
      %v224 = vpop.f32.mrf.mxu0
      %v225 = vadd.f32 %v205, %v224
      %226 = vdwg.mxu0
      %227 = vmatpush.msra.mxu0 %v202
      %228 = vmatpush.msra.mxu0 %v201
      %229 = vmatpush.msra.mxu0 %v200
      %230 = vmatpush.msra.mxu0 %v199
      %231 = vmatpush.msra.mxu0 %v198
      %232 = vmatpush.msra.mxu0 %v197
      %233 = vmatpush.msra.mxu0 %v196
      %234 = vmatpush.msra.mxu0 %v195
      %235 = vmatpush.msra.mxu0 %v194
      %236 = vmatpush.msra.mxu0 %v193
      %237 = vmatpush.msra.mxu0 %v192
      %238 = vmatpush.msra.mxu0 %v191
      %239 = vmatpush.msra.mxu0 %v190
      %240 = vmatpush.msra.mxu0 %v189
      %241 = vmatpush.msra.mxu0 %v188
      %242 = vmatpush.msra.mxu0 %v187
      %243 = vmatmul.f32.gmra.mxu0 %v170
      %v244 = vpop.f32.mrf.mxu0
      %v245 = vadd.f32 %v225, %v244
      %246 = vdwg.mxu0
      %247 = vst [vmem:[%s168] sm:$0xff] %v245
      %p248 = scmp.lt.s32.totalorder %s14, 1
      %s249 = scalar_select %p248, %s14, 1
      %s250 = smul.addr %s249, 8
      %s251 = scalar_lea.vmem %s3, %s250
      // Predicated region
      $region33: #{cf_conv_linear_net_pallas.1} parent=31 // pred_check
        %p252 = pneg %p100
      $region34: #{cf_conv_linear_net_pallas.1} parent=31 // pred_check_branch
        %254 = sbr.rel (%p252) target = $region36
      $region35: #{cf_conv_linear_net_pallas.1} parent=31 // pred_region
        _
      $region36: #{cf_conv_linear_net_pallas.1} parent=31 // pred_fallthru
        _
    $region32: #{cf_conv_linear_net_pallas.1} parent=5 // pred_fallthru
      _
    %p255 = scmp.le.s32.totalorder 2, %s9
    // Predicated region
    $region37: #{cf_conv_linear_net_pallas.1} parent=5 // pred_check
      %p256 = pneg %p255
    $region38: #{cf_conv_linear_net_pallas.1} parent=5 // pred_check_branch
      %258 = sbr.rel (%p256) target = $region40
    $region39: #{cf_conv_linear_net_pallas.1} parent=5 // pred_region
      %s259 = ssub.s32 %s9, 2
      // Predicated region
      $region41: #{cf_conv_linear_net_pallas.1} parent=39 // pred_check
        %p260 = pneg %p106
      $region42: #{cf_conv_linear_net_pallas.1} parent=39 // pred_check_branch
        %262 = sbr.rel (%p260) target = $region44
      $region43: #{cf_conv_linear_net_pallas.1} parent=39 // pred_region
        %p263 = scmp.lt.s32.totalorder %s15, 1
        %s264 = scalar_select %p263, %s15, 1
        %s265 = smul.addr %s264, 8
        %s266 = scalar_lea.vmem %s3, %s265
      $region44: #{cf_conv_linear_net_pallas.1} parent=39 // pred_fallthru
        _
    $region40: #{cf_conv_linear_net_pallas.1} parent=5 // pred_fallthru
      _
  $region6: #{cf_conv_linear_net_pallas.1} parent=0 // loop_footer
    %s13 = sadd.s32 1, %s9
  $region7: #{cf_conv_linear_net_pallas.1} parent=0 // loop_footer_branch
    %8 = sbr.rel target = $region3
  $region8: #{cf_conv_linear_net_pallas.1} parent=0 // loop_exit
    _

</llo_original>
